<compile_context>
chip_gen: v7x
topology: tpu7x:2x2x1
jax: 0.10.0
libtpu: 0.0.40
codegen_flags: <defaults>
</compile_context>

<pallas_src>
import functools

import jax
import jax.numpy as jnp
from jax.experimental import pallas as pl
from jax.experimental.pallas import tpu as pltpu


def _nce_loss_kernel(x_ref, o_ref, m_scr, l_scr, pos_scr, *, B, K, TB, TK):
    """Online-logsumexp NCE loss partial sums.

    x_ref:   (TB, TK) logits tile (any float dtype)
    o_ref:   (1, 1, 1) per-batch-tile partial sum of (lse - pos)
    m_scr:   (TB, 1) running row max          (f32 VMEM scratch)
    l_scr:   (TB, 1) running row sum exp      (f32 VMEM scratch)
    pos_scr: (TB, 1) class-0 logit per row    (f32 VMEM scratch)
    """
    i = pl.program_id(0)          # batch-tile index
    k = pl.program_id(1)          # class-tile index (reduction axis)
    nk = pl.num_programs(1)

    x = x_ref[...].astype(jnp.float32)                       # (TB, TK)

    if K % TK != 0:
        # Mask padded class columns of the last K tile (static check).
        col = k * TK + jax.lax.broadcasted_iota(jnp.int32, (TB, TK), 1)
        x = jnp.where(col < K, x, jnp.float32(-1e30))

    @pl.when(k == 0)
    def _init():
        m_scr[...] = jnp.full((TB, 1), -jnp.inf, dtype=jnp.float32)
        l_scr[...] = jnp.zeros((TB, 1), dtype=jnp.float32)
        # Class 0 (the positive) lives in the first K tile.
        pos_scr[...] = x[:, 0:1]

    # Online logsumexp merge for this K tile.
    m_prev = m_scr[...]
    m_new = jnp.maximum(m_prev, jnp.max(x, axis=-1, keepdims=True))
    l_scr[...] = (l_scr[...] * jnp.exp(m_prev - m_new)
                  + jnp.sum(jnp.exp(x - m_new), axis=-1, keepdims=True))
    m_scr[...] = m_new

    @pl.when(k == nk - 1)
    def _finalize():
        per_row = m_scr[...] + jnp.log(l_scr[...]) - pos_scr[...]   # (TB, 1)
        if B % TB != 0:
            # Mask padded rows of the last batch tile (static check).
            row = i * TB + jax.lax.broadcasted_iota(jnp.int32, (TB, 1), 0)
            per_row = jnp.where(row < B, per_row, jnp.float32(0.0))
        o_ref[...] = jnp.sum(per_row, axis=0, keepdims=True).reshape(1, 1, 1)


def nce_softmax_loss(x, *, tb=None, tk=None):
    """x: (bsz, 1, K) or (bsz, K) logits (f32 or bf16). Returns scalar f32 loss."""
    B = x.shape[0]
    # Robust "squeeze": (B, 1, K) -> (B, K); also handles B == 1 cleanly.
    xs = x.reshape(B, -1)
    K = xs.shape[1]

    # Tile selection (mem-bound kernel: keep tiles big, under scoped VMEM budget
    # with double-buffering; sized to fit v7x's smaller 64 MiB VMEM as well).
    if tb is None:
        tb = B if B <= 512 else 512            # full batch or 512-row tiles
    if tk is None:
        tk = K if K <= 2048 else 2048          # full K or 2048-wide tiles
    tb = min(tb, B)
    tk = min(tk, K)
    # Mosaic tiling constraints: block dims multiple of (8, 128) or full extent.
    if tb != B:
        assert tb % 8 == 0, "batch tile must be a multiple of 8 (or == B)"
    if tk != K:
        assert tk % 128 == 0, "class tile must be a multiple of 128 (or == K)"

    nb = pl.cdiv(B, tb)
    nk = pl.cdiv(K, tk)

    kernel = functools.partial(_nce_loss_kernel, B=B, K=K, TB=tb, TK=tk)

    partials = pl.pallas_call(
        kernel,
        out_shape=jax.ShapeDtypeStruct((nb, 1, 1), jnp.float32),
        grid_spec=pltpu.PrefetchScalarGridSpec(
            num_scalar_prefetch=0,
            grid=(nb, nk),                                   # reduction axis last
            in_specs=[pl.BlockSpec((tb, tk), lambda i, k: (i, k))],
            out_specs=pl.BlockSpec((1, 1, 1), lambda i, k: (i, 0, 0)),
            scratch_shapes=[pltpu.VMEM((tb, 1), jnp.float32)] * 3,
        ),
        compiler_params=pltpu.CompilerParams(
            dimension_semantics=("parallel", "arbitrary"),
            vmem_limit_bytes=32 * 1024 * 1024,
        ),
    )(xs)

    # Tiny final reduction + mean (CrossEntropyLoss default reduction='mean').
    return jnp.sum(partials) / B


def _reference_loss(x):
    xs = x.reshape(x.shape[0], -1).astype(jnp.float32)
    return jnp.mean(-jax.nn.log_softmax(xs, axis=-1)[:, 0])


if __name__ == "__main__":
    key = jax.random.PRNGKey(0)

    # Primary check: shape matching the module's expected input (bsz, 1, K), f32.
    bsz, num_classes = 8, 384
    x = jax.random.normal(key, (bsz, 1, num_classes), dtype=jnp.float32)
    loss = nce_softmax_loss(x)
    jax.block_until_ready(loss)
    ref = _reference_loss(x)
    assert jnp.allclose(loss, ref, rtol=1e-5, atol=1e-5), (loss, ref)

    # Tiled + masked path: non-divisible B and K with explicit small tiles
    # (exercises the 2-D grid, online logsumexp, row/column masking).
    k2 = jax.random.PRNGKey(1)
    x2 = jax.random.normal(k2, (20, 1, 300), dtype=jnp.float32)
    loss2 = nce_softmax_loss(x2, tb=16, tk=256)
    jax.block_until_ready(loss2)
    ref2 = _reference_loss(x2)
    assert jnp.allclose(loss2, ref2, rtol=1e-5, atol=1e-5), (loss2, ref2)

    # bf16 input path (halves HBM traffic; f32 math in-kernel).
    x_bf16 = x.astype(jnp.bfloat16)
    loss3 = nce_softmax_loss(x_bf16)
    jax.block_until_ready(loss3)
    ref3 = _reference_loss(x_bf16)  # reference on the same bf16-rounded logits
    assert jnp.allclose(loss3, ref3, rtol=1e-3, atol=1e-3), (loss3, ref3)

    print("KERNEL_OK")
</pallas_src>

<mosaic_0001>
module attributes {stable_mosaic.version = 11 : i64} {
  func.func @_nce_loss_kernel(%arg0: i32, %arg1: i32, %arg2: memref<8x384xf32, #tpu.memory_space<vmem>>, %arg3: memref<1x1x1xf32, #tpu.memory_space<vmem>>, %arg4: memref<8x1xf32, #tpu.memory_space<vmem>>, %arg5: memref<8x1xf32, #tpu.memory_space<vmem>>, %arg6: memref<8x1xf32, #tpu.memory_space<vmem>>) attributes {dimension_semantics = [#tpu.dimension_semantics<parallel>, #tpu.dimension_semantics<arbitrary>], iteration_bounds = array<i64: 1, 1>, scalar_prefetch = 0 : i64, scratch_operands = 3 : i64, tpu.core_type = #tpu.core_type<tc>, window_params = [{transform_indices = @transform_0, window_bounds = array<i64: 8, 384>}, {transform_indices = @transform_1, window_bounds = array<i64: 1, 1, 1>}]} {
    %c0 = arith.constant 0 : index
    %c0_0 = arith.constant 0 : index
    %0 = vector.load %arg2[%c0, %c0_0] : memref<8x384xf32, #tpu.memory_space<vmem>>, vector<8x384xf32>
    %c0_i32 = arith.constant 0 : i32
    %1 = arith.cmpi eq, %arg1, %c0_i32 : i32
    %2 = arith.extui %1 : i1 to i32
    %c0_i32_1 = arith.constant 0 : i32
    %3 = arith.cmpi ne, %2, %c0_i32_1 : i32
    scf.if %3 {
      %cst_13 = arith.constant 0xFF800000 : f32
      %23 = vector.broadcast %cst_13 : f32 to vector<8x1xf32>
      %c0_14 = arith.constant 0 : index
      %c0_15 = arith.constant 0 : index
      %24 = vector.load %arg4[%c0_14, %c0_15] : memref<8x1xf32, #tpu.memory_space<vmem>>, vector<8x1xf32>
      tpu.vector_store %arg4[%c0_14, %c0_15], %23 {strides = array<i32>} : memref<8x1xf32, #tpu.memory_space<vmem>>, vector<8x1xf32>,
      %cst_16 = arith.constant 0.000000e+00 : f32
      %25 = vector.broadcast %cst_16 : f32 to vector<8x1xf32>
      %c0_17 = arith.constant 0 : index
      %c0_18 = arith.constant 0 : index
      %26 = vector.load %arg5[%c0_17, %c0_18] : memref<8x1xf32, #tpu.memory_space<vmem>>, vector<8x1xf32>
      tpu.vector_store %arg5[%c0_17, %c0_18], %25 {strides = array<i32>} : memref<8x1xf32, #tpu.memory_space<vmem>>, vector<8x1xf32>,
      %27 = vector.extract_strided_slice %0 {offsets = [0, 0], sizes = [8, 1], strides = [1, 1]} : vector<8x384xf32> to vector<8x1xf32>
      %c0_19 = arith.constant 0 : index
      %c0_20 = arith.constant 0 : index
      %28 = vector.load %arg6[%c0_19, %c0_20] : memref<8x1xf32, #tpu.memory_space<vmem>>, vector<8x1xf32>
      tpu.vector_store %arg6[%c0_19, %c0_20], %27 {strides = array<i32>} : memref<8x1xf32, #tpu.memory_space<vmem>>, vector<8x1xf32>,
    } else {
    }
    %c0_2 = arith.constant 0 : index
    %c0_3 = arith.constant 0 : index
    %4 = vector.load %arg4[%c0_2, %c0_3] : memref<8x1xf32, #tpu.memory_space<vmem>>, vector<8x1xf32>
    %cst = arith.constant dense<0xFF800000> : vector<8xf32>
    %5 = vector.multi_reduction <maximumf>, %0, %cst [1] : vector<8x384xf32> to vector<8xf32>
    %6 = vector.shape_cast %5 : vector<8xf32> to vector<8x1xf32>
    %7 = arith.maximumf %4, %6 : vector<8x1xf32>
    %c0_4 = arith.constant 0 : index
    %c0_5 = arith.constant 0 : index
    %8 = vector.load %arg5[%c0_4, %c0_5] : memref<8x1xf32, #tpu.memory_space<vmem>>, vector<8x1xf32>
    %9 = arith.subf %4, %7 : vector<8x1xf32>
    %10 = math.exp %9 : vector<8x1xf32>
    %11 = arith.mulf %8, %10 : vector<8x1xf32>
    %12 = vector.broadcast %7 : vector<8x1xf32> to vector<8x384xf32>
    %13 = arith.subf %0, %12 : vector<8x384xf32>
    %14 = math.exp %13 : vector<8x384xf32>
    %cst_6 = arith.constant dense<0.000000e+00> : vector<8xf32>
    %15 = vector.multi_reduction <add>, %14, %cst_6 [1] : vector<8x384xf32> to vector<8xf32>
    %16 = vector.shape_cast %15 : vector<8xf32> to vector<8x1xf32>
    %17 = arith.addf %11, %16 : vector<8x1xf32>
    %c0_7 = arith.constant 0 : index
    %c0_8 = arith.constant 0 : index
    %18 = vector.load %arg5[%c0_7, %c0_8] : memref<8x1xf32, #tpu.memory_space<vmem>>, vector<8x1xf32>
    tpu.vector_store %arg5[%c0_7, %c0_8], %17 {strides = array<i32>} : memref<8x1xf32, #tpu.memory_space<vmem>>, vector<8x1xf32>,
    %c0_9 = arith.constant 0 : index
    %c0_10 = arith.constant 0 : index
    %19 = vector.load %arg4[%c0_9, %c0_10] : memref<8x1xf32, #tpu.memory_space<vmem>>, vector<8x1xf32>
    tpu.vector_store %arg4[%c0_9, %c0_10], %7 {strides = array<i32>} : memref<8x1xf32, #tpu.memory_space<vmem>>, vector<8x1xf32>,
    %c0_i32_11 = arith.constant 0 : i32
    %20 = arith.cmpi eq, %arg1, %c0_i32_11 : i32
    %21 = arith.extui %20 : i1 to i32
    %c0_i32_12 = arith.constant 0 : i32
    %22 = arith.cmpi ne, %21, %c0_i32_12 : i32
    scf.if %22 {
      %c0_13 = arith.constant 0 : index
      %c0_14 = arith.constant 0 : index
      %23 = vector.load %arg4[%c0_13, %c0_14] : memref<8x1xf32, #tpu.memory_space<vmem>>, vector<8x1xf32>
      %c0_15 = arith.constant 0 : index
      %c0_16 = arith.constant 0 : index
      %24 = vector.load %arg5[%c0_15, %c0_16] : memref<8x1xf32, #tpu.memory_space<vmem>>, vector<8x1xf32>
      %25 = math.log %24 : vector<8x1xf32>
      %26 = arith.addf %23, %25 : vector<8x1xf32>
      %c0_17 = arith.constant 0 : index
      %c0_18 = arith.constant 0 : index
      %27 = vector.load %arg6[%c0_17, %c0_18] : memref<8x1xf32, #tpu.memory_space<vmem>>, vector<8x1xf32>
      %28 = arith.subf %26, %27 : vector<8x1xf32>
      %cst_19 = arith.constant dense<0.000000e+00> : vector<1xf32>
      %29 = vector.multi_reduction <add>, %28, %cst_19 [0] : vector<8x1xf32> to vector<1xf32>
      %30 = vector.shape_cast %29 : vector<1xf32> to vector<1x1xf32>
      %31 = vector.shape_cast %30 : vector<1x1xf32> to vector<1x1x1xf32>
      %c0_20 = arith.constant 0 : index
      %c0_21 = arith.constant 0 : index
      %c0_22 = arith.constant 0 : index
      %32 = vector.load %arg3[%c0_20, %c0_21, %c0_22] : memref<1x1x1xf32, #tpu.memory_space<vmem>>, vector<1x1x1xf32>
      tpu.vector_store %arg3[%c0_20, %c0_21, %c0_22], %31 {strides = array<i32>} : memref<1x1x1xf32, #tpu.memory_space<vmem>>, vector<1x1x1xf32>,
    } else {
    }
    return
  }
  func.func @transform_0(%arg0: i32, %arg1: i32) -> (i32, i32) {
    %c0_i32 = arith.constant 0 : i32
    return %arg0, %arg1 : i32, i32
  }
  func.func @transform_1(%arg0: i32, %arg1: i32) -> (i32, i32, i32) {
    %c0_i32 = arith.constant 0 : i32
    %c0_i32_0 = arith.constant 0 : i32
    %c0_i32_1 = arith.constant 0 : i32
    return %arg0, %c0_i32, %c0_i32_0 : i32, i32, i32
  }
}

</mosaic_0001>

<llo_original>
// kernel: tpu_custom_call.1
$region0: #{tpu_custom_call.1}
  #allocation0 [shape = 'u32[]', space=smem, size = 0x4, offset = 0x4, fixed_abs, tag = 'smem constant byte address 0x4 - core index']
  #allocation1 [shape = 'u32[144,128]{1,0:T(1,128)}', space=vmem, size = 0x12000, scoped, tag = 'internal scratch']
  #allocation2 [shape = 'f32[8,1]{1,0:T(8,128)}', space=vmem, size = 0x1000, scoped, tag = 'scratch operand']
  #allocation3 [shape = 'f32[8,1]{1,0:T(8,128)}', space=vmem, size = 0x1000, scoped, tag = 'scratch operand']
  #allocation4 [shape = 'f32[8,1]{1,0:T(8,128)}', space=vmem, size = 0x1000, scoped, tag = 'scratch operand']
  %s0 = inlined_call_operand.hbm [shape: f32[8,384], index: 0, kind: input, shape index: {}]
  %s1 = inlined_call_operand.hbm [shape: f32[1,1,1], index: 1, kind: output, shape index: {}]
  %s2 = sld [smem:[#allocation0]]
  $region26: #{tpu_custom_call.1} parent=0
    _
  %s4 = ssub.s32 1, %s2
  %s5 = scalar_select 0, %s4, %s2
  $region1: #{tpu_custom_call.1} parent=0
    #allocation5 [shape = 'u8[12288]{0}', space=vmem, size = 0x3000, scoped, tag = 'input window, operand 0, single buffered']
    #allocation6 [shape = 's32[1]{0}', space=sflag, size = 0x4, scoped, tag = 'scoped memory for tpu_custom_call.1']
    #allocation7 [shape = 's32[1]{0}', space=sflag, size = 0x4, scoped, tag = 'scoped memory for tpu_custom_call.1']
    #allocation8 [shape = 'u8[512]{0}', space=vmem, size = 0x400, scoped, tag = 'output window, operand 0, single buffered']
    %6 = vsyncpa [#allocation6], 0
    %7 = vsyncpa [#allocation7], 0
    // Predicated region
    $region2: #{tpu_custom_call.1} parent=1 // pred_check
      _
    $region3: #{tpu_custom_call.1} parent=1 // pred_check_branch
      %9 = sbr.rel (0) target = $region5
    $region4: #{tpu_custom_call.1} parent=1 // pred_region
      %s11 = ssub.s32 384, 384
      %12 = vsyncadd [#allocation6], %s11
      %s14 = sshll.u32 [#allocation5], 4
      %s15 = int_to_ptr.vmem [resolvable:$true] %s14
      %17 = dma.hbm_to_vmem [thread:$0]  %s0, 384, %s15, [#allocation6]
    $region5: #{tpu_custom_call.1} parent=1 // pred_fallthru
      _
    // Predicated region
    $region6: #{tpu_custom_call.1} parent=1 // pred_check
      _
    $region7: #{tpu_custom_call.1} parent=1 // pred_check_branch
      %19 = sbr.rel (0) target = $region9
    $region8: #{tpu_custom_call.1} parent=1 // pred_region
      %20 = dma.done [#allocation6], 384
    $region9: #{tpu_custom_call.1} parent=1 // pred_fallthru
      _
    %v21 = vld [vmem:[#allocation5] sm:$0xff]
    %v22 = vld [vmem:[#allocation5 + $0x8] sm:$0xff]
    %v23 = vld [vmem:[#allocation5 + $0x10] sm:$0xff]
    %p24 = scmp.eq.s32.totalorder 0, 0
    // Predicated region
    $region10: #{tpu_custom_call.1} parent=1 // pred_check
      %p25 = pneg %p24
    $region11: #{tpu_custom_call.1} parent=1 // pred_check_branch
      %27 = sbr.rel (%p25) target = $region13
    $region12: #{tpu_custom_call.1} parent=1 // pred_region
      %vm28 = vcmask 7168
      %29 = vst.msk [vmem:[#allocation2] sm:$0xff] %vm28, -inf
      %30 = vst.msk [vmem:[#allocation3] sm:$0xff] %vm28, 0.0
      %31 = vst.msk [vmem:[#allocation4] sm:$0xff] %vm28, %v21
    $region13: #{tpu_custom_call.1} parent=1 // pred_fallthru
      _
    %v32 = vld [vmem:[#allocation2] sm:$0xff]
    %v33 = vmax.f32 %v21, %v22
    %v34 = vmax.f32 %v33, %v23
    %35 = vmax.xlane.f32.xlu0 %v34
    %v36 = vpop.xlane.xlu0 %35
    %v37 = vmax.f32 %v32, %v36
    %v38 = vld [vmem:[#allocation3] sm:$0xff]
    %v39 = vsub.f32 %v32, %v37
    %v40 = vmul.f32 %v39, 1.442695
    %v41 = vpow.pop %v40
    %v42 = vmul.f32 %v38, %v41
    %44 = vset.pattern.permute.xlu0 0
    %45 = vperm.xlu0 %44, %v37
    %v46 = vpop.permute.xlu0 %45
    %v48 = vsub.f32 %v21, %v46
    %v49 = vsub.f32 %v22, %v46
    %v50 = vsub.f32 %v23, %v46
    %v51 = vmul.f32 %v48, 1.442695
    %v52 = vpow.pop %v51
    %v53 = vmul.f32 %v49, 1.442695
    %v54 = vpow.pop %v53
    %v55 = vmul.f32 %v50, 1.442695
    %v56 = vpow.pop %v55
    %v57 = vadd.f32 %v52, %v54
    %v58 = vadd.f32 %v57, %v56
    %59 = vadd.xlane.f32.xlu0 %v58
    %v60 = vpop.xlane.xlu0 %59
    %v61 = vadd.f32 %v42, %v60
    %vm62 = vcmask 7168
    %63 = vst.msk [vmem:[#allocation3] sm:$0xff] %vm62, %v61
    %64 = vst.msk [vmem:[#allocation2] sm:$0xff] %vm62, %v37
    // Predicated region
    $region14: #{tpu_custom_call.1} parent=1 // pred_check
      %p65 = pneg %p24
    $region15: #{tpu_custom_call.1} parent=1 // pred_check_branch
      %67 = sbr.rel (%p65) target = $region17
    $region16: #{tpu_custom_call.1} parent=1 // pred_region
      %v68 = vld [vmem:[#allocation2] sm:$0xff]
      %v69 = vld [vmem:[#allocation3] sm:$0xff]
      %v70 = vlog2.pop %v69
      %v71 = vmul.f32 %v70, 0.6931472
      %v72 = vadd.f32 %v68, %v71
      %v73 = vld [vmem:[#allocation4] sm:$0xff]
      %v74 = vsub.f32 %v72, %v73
      %v75 = vsel %vm62, %v74, 0.0
      %v76 = vrot.slane %v75, 4
      %v77 = vadd.f32 %v75, %v76
      %v78 = vrot.slane %v77, 2
      %v79 = vadd.f32 %v77, %v78
      %v80 = vrot.slane %v79, 1
      %v81 = vadd.f32 %v79, %v80
      %vm82 = vcmask 0
      %83 = vst.msk [vmem:[#allocation8] sm:$0x1] %vm82, %v81
    $region17: #{tpu_custom_call.1} parent=1 // pred_fallthru
      _
    // Predicated region
    $region18: #{tpu_custom_call.1} parent=1 // pred_check
      _
    $region19: #{tpu_custom_call.1} parent=1 // pred_check_branch
      %85 = sbr.rel (0) target = $region21
    $region20: #{tpu_custom_call.1} parent=1 // pred_region
      %s87 = ssub.s32 16, 16
      %88 = vsyncadd [#allocation7], %s87
      %s90 = sshll.u32 [#allocation8], 4
      %s91 = int_to_ptr.vmem [resolvable:$true] %s90
      %93 = dma.vmem_to_hbm [thread:$0]  %s91, 16, %s1, [#allocation7]
    $region21: #{tpu_custom_call.1} parent=1 // pred_fallthru
      _
    // Predicated region
    $region22: #{tpu_custom_call.1} parent=1 // pred_check
      _
    $region23: #{tpu_custom_call.1} parent=1 // pred_check_branch
      %95 = sbr.rel (0) target = $region25
    $region24: #{tpu_custom_call.1} parent=1 // pred_region
      %96 = dma.done [#allocation7], 16
    $region25: #{tpu_custom_call.1} parent=1 // pred_fallthru
      _
    %97 = vsyncpa [#allocation6], 1
    %98 = vsyncpa [#allocation7], 1

</llo_original>
